<compile_context>
chip_gen: v7x
topology: tpu7x:2x2x1
jax: 0.10.0
libtpu: 0.0.40
codegen_flags: <defaults>
</compile_context>

<pallas_src>
import jax
import jax.numpy as jnp
from jax import lax
from jax.experimental import pallas as pl
from jax.experimental.pallas import tpu as pltpu


def _critic_kernel(x_ref, w1_ref, b1_ref, w2_ref, b2_ref, w3_ref, b3_ref,
                   q_ref):
    """Both SAC Q-heads fused along the lane dimension (one GEMM per layer)."""
    cd = w1_ref.dtype                       # MXU operand dtype (f32 or bf16)
    x = x_ref[...]                          # (Bb, SD+A), already in cd

    # Layer 1 (conv folded in, both heads side by side): (Bb, 2H) f32.
    h = jnp.maximum(
        jnp.dot(x, w1_ref[...], preferred_element_type=jnp.float32)
        + b1_ref[...], 0.0)
    # Layer 2: block-diagonal W2 keeps the heads independent.
    h = jnp.maximum(
        jnp.dot(h.astype(cd), w2_ref[...], preferred_element_type=jnp.float32)
        + b2_ref[...], 0.0)
    # Layer 3 (2H -> 2 heads): (2, 2H) x (Bb, 2H)^T so the result lands
    # lane-major (batch on lanes) with no relayout and no N=1 MXU pass.
    q = lax.dot_general(
        w3_ref[...], h.astype(cd), (((1,), (1,)), ((), ())),
        preferred_element_type=jnp.float32) + b3_ref[...]   # (2, Bb)

    q_ref[...] = q.astype(q_ref.dtype)


def prepare_critic_params(params, action_dim, dot_dtype=jnp.float32):
    """Fold Conv1d(k=1) into layer 1, fuse the two heads, cast matmul weights."""
    cw = params["cw"][:, :, 0].astype(jnp.float32)       # (2, S)
    cb = params["cb"][:, 0, 0].astype(jnp.float32)       # (2,)
    W1 = params["W1"].astype(jnp.float32)                # (2, F, H)
    b1 = params["b1"][:, 0, :].astype(jnp.float32)       # (2, H)
    W2 = params["W2"].astype(jnp.float32)                # (2, H, H)
    b2 = params["b2"][:, 0, :].astype(jnp.float32)       # (2, H)
    W3 = params["W3"][:, :, 0].astype(jnp.float32)       # (2, H)
    b3 = params["b3"][:, :, 0].astype(jnp.float32)       # (2, 1)

    S = cw.shape[1]
    F, H = W1.shape[1], W1.shape[2]
    D = F - action_dim

    # Conv fold.
    W1_state, W1_action = W1[:, :D, :], W1[:, D:, :]      # (2,D,H), (2,A,H)
    W1s = jnp.einsum("is,idh->isdh", cw, W1_state).reshape(2, S * D, H)
    W1a = cw.sum(axis=1)[:, None, None] * W1_action       # (2, A, H)
    b1f = b1 + cb[:, None] * W1.sum(axis=1)               # (2, H)

    # Fold action into state along K, then fuse the two heads along N.
    W1k = jnp.concatenate([W1s, W1a], axis=1)             # (2, SD+A, H)
    W1f = jnp.concatenate([W1k[0], W1k[1]], axis=1)       # (SD+A, 2H)
    b1F = jnp.concatenate([b1f[0], b1f[1]], axis=0)[None, :]   # (1, 2H)

    Z = jnp.zeros((H, H), jnp.float32)
    W2f = jnp.block([[W2[0], Z], [Z, W2[1]]])             # (2H, 2H) block-diag
    b2F = jnp.concatenate([b2[0], b2[1]], axis=0)[None, :]     # (1, 2H)

    zH = jnp.zeros((H,), jnp.float32)
    W3f = jnp.stack([jnp.concatenate([W3[0], zH]),
                     jnp.concatenate([zH, W3[1]])], axis=0)    # (2, 2H)

    return dict(
        W1=W1f.astype(dot_dtype),        # (SD+A, 2H)
        b1=b1F,                          # (1, 2H)  f32
        W2=W2f.astype(dot_dtype),        # (2H, 2H)
        b2=b2F,                          # (1, 2H)  f32
        W3=W3f.astype(dot_dtype),        # (2, 2H)
        b3=b3,                           # (2, 1)   f32
    )


def critic_forward(prepared, state, action, *, max_block_b=1024):
    """Pallas Critic forward. state: (B,S,D), action: (B,A) -> (q1, q2), each (B,1).

    max_block_b must be a multiple of 128 (it is only used when B exceeds it,
    in which case the lane-dense (2, bb) output block needs bb % 128 == 0).
    On v7x, choose it so the batch grid has >= 2 steps for large B (2 TCs).
    """
    B, S, D = state.shape
    A = action.shape[-1]
    SD = S * D
    K = SD + A
    H2 = prepared["W2"].shape[-1]        # 2 * hidden_dim
    cd = prepared["W1"].dtype

    # Single small 2-D concat + cast (bf16 path moves bf16 over the DMA).
    x = jnp.concatenate(
        [state.reshape(B, SD).astype(jnp.float32),
         action.astype(jnp.float32)], axis=-1).astype(cd)    # (B, SD+A)

    if B <= max_block_b:
        bb = B
    else:
        assert max_block_b % 128 == 0, "max_block_b must be a multiple of 128"
        bb = max_block_b
    grid = (pl.cdiv(B, bb),)
    const2 = lambda i: (0, 0)            # weights: VMEM-resident across blocks

    q = pl.pallas_call(
        _critic_kernel,
        out_shape=jax.ShapeDtypeStruct((2, B), jnp.float32),
        grid=grid,
        in_specs=[
            pl.BlockSpec((bb, K), lambda i: (i, 0)),   # fused state|action
            pl.BlockSpec((K, H2), const2),             # layer-1 weight (fused)
            pl.BlockSpec((1, H2), const2),             # layer-1 bias
            pl.BlockSpec((H2, H2), const2),            # layer-2 block-diag
            pl.BlockSpec((1, H2), const2),             # layer-2 bias
            pl.BlockSpec((2, H2), const2),             # layer-3 rows
            pl.BlockSpec((2, 1), const2),              # layer-3 bias
        ],
        out_specs=pl.BlockSpec((2, bb), lambda i: (0, i)),
        compiler_params=pltpu.CompilerParams(
            dimension_semantics=("parallel",)),
    )(x, prepared["W1"], prepared["b1"], prepared["W2"], prepared["b2"],
      prepared["W3"], prepared["b3"])

    return q[0][:, None], q[1][:, None]   # (B, 1) each, matching torch


def init_critic_params(key, S, F, H):
    """Deterministic synthetic init of the two stacked Q-heads (leading dim = 2)."""
    ks = jax.random.split(key, 4)

    def w(k, shape, scale):
        return (scale * jax.random.normal(k, shape)).astype(jnp.float32)

    return dict(
        cw=w(ks[0], (2, S, 1), 1.0 / S),                 # Conv1d(S, 1, 1) weight
        cb=jnp.zeros((2, 1, 1), jnp.float32),            # Conv1d bias
        W1=w(ks[1], (2, F, H), (2.0 / F) ** 0.5),
        b1=jnp.zeros((2, 1, H), jnp.float32),
        W2=w(ks[2], (2, H, H), (2.0 / H) ** 0.5),
        b2=jnp.zeros((2, 1, H), jnp.float32),
        W3=w(ks[3], (2, H, 1), (1.0 / H) ** 0.5),
        b3=jnp.zeros((2, 1, 1), jnp.float32),
    )


def critic_ref(params, state, action):
    """Pure-JAX reference of the same forward pass (for verification)."""
    B, S, D = state.shape
    A = action.shape[-1]
    a = jnp.broadcast_to(action[:, None, :], (B, S, A))
    sa = jnp.concatenate([state, a], axis=-1)

    def head(i):
        y = jnp.einsum("bsf,s->bf", sa, params["cw"][i, :, 0]) + params["cb"][i, 0, 0]
        h = jax.nn.relu(y @ params["W1"][i] + params["b1"][i])
        h = jax.nn.relu(h @ params["W2"][i] + params["b2"][i])
        return h @ params["W3"][i] + params["b3"][i]

    return head(0), head(1)


if __name__ == "__main__":
    # Small shapes consistent with the module: stacked state (S frames of D
    # features), continuous action of dim A, hidden width H, batch B.
    B, S, D, A, H = 8, 4, 12, 4, 32

    key = jax.random.PRNGKey(0)
    k_state, k_action, k_params = jax.random.split(key, 3)
    state = jax.random.normal(k_state, (B, S, D), dtype=jnp.float32)
    action = jnp.tanh(jax.random.normal(k_action, (B, A), dtype=jnp.float32))
    params = init_critic_params(k_params, S, D + A, H)

    r1, r2 = critic_ref(params, state, action)

    # f32 MXU operands: exact-ish check against the pure-JAX reference.
    prep32 = prepare_critic_params(params, A, jnp.float32)
    q1, q2 = critic_forward(prep32, state, action)
    jax.block_until_ready((q1, q2))
    assert q1.shape == (B, 1) and q2.shape == (B, 1)
    assert jnp.allclose(q1, r1, atol=1e-4, rtol=1e-4)
    assert jnp.allclose(q2, r2, atol=1e-4, rtol=1e-4)

    # bf16 MXU operands (works on v5e/v6e/v7x; f32 accumulate, f32 VPU work).
    prep16 = prepare_critic_params(params, A, jnp.bfloat16)
    p1, p2 = critic_forward(prep16, state, action)
    jax.block_until_ready((p1, p2))
    assert jnp.allclose(p1, r1, atol=5e-2, rtol=5e-2)
    assert jnp.allclose(p2, r2, atol=5e-2, rtol=5e-2)

    # Multi-block path with B not a multiple of the batch block (last grid
    # step computes on padded rows; rows are independent, stores are masked).
    B2 = 300
    k2s, k2a = jax.random.split(jax.random.PRNGKey(1), 2)
    state2 = jax.random.normal(k2s, (B2, S, D), dtype=jnp.float32)
    action2 = jnp.tanh(jax.random.normal(k2a, (B2, A), dtype=jnp.float32))
    g1, g2 = critic_forward(prep32, state2, action2, max_block_b=128)
    jax.block_until_ready((g1, g2))
    t1, t2 = critic_ref(params, state2, action2)
    assert g1.shape == (B2, 1) and g2.shape == (B2, 1)
    assert jnp.allclose(g1, t1, atol=1e-4, rtol=1e-4)
    assert jnp.allclose(g2, t2, atol=1e-4, rtol=1e-4)

    print("KERNEL_OK")
</pallas_src>

<mosaic_0001>
module attributes {stable_mosaic.version = 11 : i64} {
  func.func @_critic_kernel(%arg0: i32, %arg1: memref<8x52xf32, #tpu.memory_space<vmem>>, %arg2: memref<52x64xf32, #tpu.memory_space<vmem>>, %arg3: memref<1x64xf32, #tpu.memory_space<vmem>>, %arg4: memref<64x64xf32, #tpu.memory_space<vmem>>, %arg5: memref<1x64xf32, #tpu.memory_space<vmem>>, %arg6: memref<2x64xf32, #tpu.memory_space<vmem>>, %arg7: memref<2x1xf32, #tpu.memory_space<vmem>>, %arg8: memref<2x8xf32, #tpu.memory_space<vmem>>) attributes {dimension_semantics = [#tpu.dimension_semantics<parallel>], iteration_bounds = array<i64: 1>, scalar_prefetch = 0 : i64, scratch_operands = 0 : i64, tpu.core_type = #tpu.core_type<tc>, window_params = [{transform_indices = @transform_0, window_bounds = array<i64: 8, 52>}, {pipeline_mode = #tpu.pipeline_mode<synchronous>, transform_indices = @transform_1, window_bounds = array<i64: 52, 64>}, {pipeline_mode = #tpu.pipeline_mode<synchronous>, transform_indices = @transform_2, window_bounds = array<i64: 1, 64>}, {pipeline_mode = #tpu.pipeline_mode<synchronous>, transform_indices = @transform_3, window_bounds = array<i64: 64, 64>}, {pipeline_mode = #tpu.pipeline_mode<synchronous>, transform_indices = @transform_4, window_bounds = array<i64: 1, 64>}, {pipeline_mode = #tpu.pipeline_mode<synchronous>, transform_indices = @transform_5, window_bounds = array<i64: 2, 64>}, {pipeline_mode = #tpu.pipeline_mode<synchronous>, transform_indices = @transform_6, window_bounds = array<i64: 2, 1>}, {transform_indices = @transform_7, window_bounds = array<i64: 2, 8>}]} {
    %c0 = arith.constant 0 : index
    %c0_0 = arith.constant 0 : index
    %0 = vector.load %arg1[%c0, %c0_0] : memref<8x52xf32, #tpu.memory_space<vmem>>, vector<8x52xf32>
    %c0_1 = arith.constant 0 : index
    %c0_2 = arith.constant 0 : index
    %1 = vector.load %arg2[%c0_1, %c0_2] : memref<52x64xf32, #tpu.memory_space<vmem>>, vector<52x64xf32>
    %cst = arith.constant dense<0.000000e+00> : vector<8x64xf32>
    %2 = tpu.matmul %0, %1, %cst {dimension_numbers = #tpu.dot_dimension_numbers<[1], [0], [0], [1], [0, 0, 1, 1], [], []>} : vector<8x52xf32>, vector<52x64xf32>, vector<8x64xf32> -> vector<8x64xf32>
    %c0_3 = arith.constant 0 : index
    %c0_4 = arith.constant 0 : index
    %3 = vector.load %arg3[%c0_3, %c0_4] : memref<1x64xf32, #tpu.memory_space<vmem>>, vector<1x64xf32>
    %4 = vector.broadcast %3 : vector<1x64xf32> to vector<8x64xf32>
    %5 = arith.addf %2, %4 : vector<8x64xf32>
    %cst_5 = arith.constant 0.000000e+00 : f32
    %6 = vector.broadcast %cst_5 : f32 to vector<8x64xf32>
    %7 = arith.maximumf %5, %6 : vector<8x64xf32>
    %c0_6 = arith.constant 0 : index
    %c0_7 = arith.constant 0 : index
    %8 = vector.load %arg4[%c0_6, %c0_7] : memref<64x64xf32, #tpu.memory_space<vmem>>, vector<64x64xf32>
    %cst_8 = arith.constant dense<0.000000e+00> : vector<8x64xf32>
    %9 = tpu.matmul %7, %8, %cst_8 {dimension_numbers = #tpu.dot_dimension_numbers<[1], [0], [0], [1], [0, 0, 1, 1], [], []>} : vector<8x64xf32>, vector<64x64xf32>, vector<8x64xf32> -> vector<8x64xf32>
    %c0_9 = arith.constant 0 : index
    %c0_10 = arith.constant 0 : index
    %10 = vector.load %arg5[%c0_9, %c0_10] : memref<1x64xf32, #tpu.memory_space<vmem>>, vector<1x64xf32>
    %11 = vector.broadcast %10 : vector<1x64xf32> to vector<8x64xf32>
    %12 = arith.addf %9, %11 : vector<8x64xf32>
    %cst_11 = arith.constant 0.000000e+00 : f32
    %13 = vector.broadcast %cst_11 : f32 to vector<8x64xf32>
    %14 = arith.maximumf %12, %13 : vector<8x64xf32>
    %c0_12 = arith.constant 0 : index
    %c0_13 = arith.constant 0 : index
    %15 = vector.load %arg6[%c0_12, %c0_13] : memref<2x64xf32, #tpu.memory_space<vmem>>, vector<2x64xf32>
    %cst_14 = arith.constant dense<0.000000e+00> : vector<2x8xf32>
    %16 = tpu.matmul %15, %14, %cst_14 {dimension_numbers = #tpu.dot_dimension_numbers<[1], [1], [0], [0], [0, 0, 1, 0], [], []>} : vector<2x64xf32>, vector<8x64xf32>, vector<2x8xf32> -> vector<2x8xf32>
    %c0_15 = arith.constant 0 : index
    %c0_16 = arith.constant 0 : index
    %17 = vector.load %arg7[%c0_15, %c0_16] : memref<2x1xf32, #tpu.memory_space<vmem>>, vector<2x1xf32>
    %18 = vector.broadcast %17 : vector<2x1xf32> to vector<2x8xf32>
    %19 = arith.addf %16, %18 : vector<2x8xf32>
    %c0_17 = arith.constant 0 : index
    %c0_18 = arith.constant 0 : index
    %20 = vector.load %arg8[%c0_17, %c0_18] : memref<2x8xf32, #tpu.memory_space<vmem>>, vector<2x8xf32>
    tpu.vector_store %arg8[%c0_17, %c0_18], %19 {strides = array<i32>} : memref<2x8xf32, #tpu.memory_space<vmem>>, vector<2x8xf32>,
    return
  }
  func.func @transform_0(%arg0: i32) -> (i32, i32) {
    %c0_i32 = arith.constant 0 : i32
    %c0_i32_0 = arith.constant 0 : i32
    return %arg0, %c0_i32 : i32, i32
  }
  func.func @transform_1(%arg0: i32) -> (i32, i32) {
    %c0_i32 = arith.constant 0 : i32
    %c0_i32_0 = arith.constant 0 : i32
    %c0_i32_1 = arith.constant 0 : i32
    return %c0_i32, %c0_i32_0 : i32, i32
  }
  func.func @transform_2(%arg0: i32) -> (i32, i32) {
    %c0_i32 = arith.constant 0 : i32
    %c0_i32_0 = arith.constant 0 : i32
    %c0_i32_1 = arith.constant 0 : i32
    return %c0_i32, %c0_i32_0 : i32, i32
  }
  func.func @transform_3(%arg0: i32) -> (i32, i32) {
    %c0_i32 = arith.constant 0 : i32
    %c0_i32_0 = arith.constant 0 : i32
    %c0_i32_1 = arith.constant 0 : i32
    return %c0_i32, %c0_i32_0 : i32, i32
  }
  func.func @transform_4(%arg0: i32) -> (i32, i32) {
    %c0_i32 = arith.constant 0 : i32
    %c0_i32_0 = arith.constant 0 : i32
    %c0_i32_1 = arith.constant 0 : i32
    return %c0_i32, %c0_i32_0 : i32, i32
  }
  func.func @transform_5(%arg0: i32) -> (i32, i32) {
    %c0_i32 = arith.constant 0 : i32
    %c0_i32_0 = arith.constant 0 : i32
    %c0_i32_1 = arith.constant 0 : i32
    return %c0_i32, %c0_i32_0 : i32, i32
  }
  func.func @transform_6(%arg0: i32) -> (i32, i32) {
    %c0_i32 = arith.constant 0 : i32
    %c0_i32_0 = arith.constant 0 : i32
    %c0_i32_1 = arith.constant 0 : i32
    return %c0_i32, %c0_i32_0 : i32, i32
  }
  func.func @transform_7(%arg0: i32) -> (i32, i32) {
    %c0_i32 = arith.constant 0 : i32
    %c0_i32_0 = arith.constant 0 : i32
    return %c0_i32, %arg0 : i32, i32
  }
}

</mosaic_0001>

<llo_original>
// kernel: tpu_custom_call.1
$region0: #{tpu_custom_call.1}
  #allocation0 [shape = 'u32[]', space=smem, size = 0x4, offset = 0x4, fixed_abs, tag = 'smem constant byte address 0x4 - core index']
  #allocation1 [shape = 'u32[144,128]{1,0:T(1,128)}', space=vmem, size = 0x12000, scoped, tag = 'internal scratch']
  %s0 = inlined_call_operand.hbm [shape: f32[8,52], index: 0, kind: input, shape index: {}]
  %s1 = inlined_call_operand.hbm [shape: f32[52,64], index: 1, kind: input, shape index: {}]
  %s2 = inlined_call_operand.vmem [shape: f32[1,64], index: 2, kind: input, shape index: {}]
  %s3 = inlined_call_operand.hbm [shape: f32[64,64], index: 3, kind: input, shape index: {}]
  %s4 = inlined_call_operand.vmem [shape: f32[1,64], index: 4, kind: input, shape index: {}]
  %s5 = inlined_call_operand.vmem [shape: f32[2,64], index: 5, kind: input, shape index: {}]
  %s6 = inlined_call_operand.vmem [shape: f32[2,1], index: 6, kind: input, shape index: {}]
  %s7 = inlined_call_operand.hbm [shape: f32[2,8], index: 7, kind: output, shape index: {}]
  %s8 = sld [smem:[#allocation0]]
  $region50: #{tpu_custom_call.1} parent=0
    _
  %s10 = ssub.s32 1, %s8
  %s11 = scalar_select 0, %s10, %s8
  $region1: #{tpu_custom_call.1} parent=0
    #allocation2 [shape = 'u8[4096]{0}', space=vmem, size = 0x1000, scoped, tag = 'input window, operand 0, single buffered']
    #allocation3 [shape = 's32[1]{0}', space=sflag, size = 0x4, scoped, tag = 'scoped memory for tpu_custom_call.1']
    #allocation4 [shape = 's32[1]{0}', space=sflag, size = 0x4, scoped, tag = 'scoped memory for tpu_custom_call.1']
    #allocation5 [shape = 'u8[28672]{0}', space=vmem, size = 0x7000, scoped, tag = 'input window, operand 1, single buffered']
    #allocation6 [shape = 's32[1]{0}', space=sflag, size = 0x4, scoped, tag = 'scoped memory for tpu_custom_call.1']
    #allocation7 [shape = 'u8[32768]{0}', space=vmem, size = 0x8000, scoped, tag = 'input window, operand 3, single buffered']
    #allocation8 [shape = 'u8[1024]{0}', space=vmem, size = 0x400, scoped, tag = 'output window, operand 0, single buffered']
    %12 = vsyncpa [#allocation3], 0
    %13 = vsyncpa [#allocation6], 0
    %14 = vsyncpa [#allocation4], 0
    // Predicated region
    $region2: #{tpu_custom_call.1} parent=1 // pred_check
      _
    $region3: #{tpu_custom_call.1} parent=1 // pred_check_branch
      %16 = sbr.rel (0) target = $region5
    $region4: #{tpu_custom_call.1} parent=1 // pred_region
      %s18 = ssub.s32 128, 128
      %19 = vsyncadd [#allocation3], %s18
      %s21 = sshll.u32 [#allocation2], 4
      %s22 = int_to_ptr.vmem [resolvable:$true] %s21
      %24 = dma.hbm_to_vmem [thread:$0]  %s0, 128, %s22, [#allocation3]
    $region5: #{tpu_custom_call.1} parent=1 // pred_fallthru
      _
    // Predicated region
    $region6: #{tpu_custom_call.1} parent=1 // pred_check
      _
    $region7: #{tpu_custom_call.1} parent=1 // pred_check_branch
      %26 = sbr.rel (0) target = $region9
    $region8: #{tpu_custom_call.1} parent=1 // pred_region
      %s28 = ssub.s32 896, 896
      %29 = vsyncadd [#allocation6], %s28
      %s30 = sshll.u32 [#allocation5], 4
      %s31 = int_to_ptr.vmem [resolvable:$true] %s30
      %36 = dma.hbm_to_vmem [thread:$0]  %s1, 896, %s31, [#allocation6], 128, 128, 8
    $region9: #{tpu_custom_call.1} parent=1 // pred_fallthru
      _
    // Predicated region
    $region10: #{tpu_custom_call.1} parent=1 // pred_check
      _
    $region11: #{tpu_custom_call.1} parent=1 // pred_check_branch
      %38 = sbr.rel (0) target = $region13
    $region12: #{tpu_custom_call.1} parent=1 // pred_region
      _
    $region13: #{tpu_custom_call.1} parent=1 // pred_fallthru
      _
    // Predicated region
    $region14: #{tpu_custom_call.1} parent=1 // pred_check
      _
    $region15: #{tpu_custom_call.1} parent=1 // pred_check_branch
      %40 = sbr.rel (0) target = $region17
    $region16: #{tpu_custom_call.1} parent=1 // pred_region
      %s42 = ssub.s32 1024, 1024
      %43 = vsyncadd [#allocation6], %s42
      %s44 = sshll.u32 [#allocation7], 4
      %s45 = int_to_ptr.vmem [resolvable:$true] %s44
      %50 = dma.hbm_to_vmem [thread:$0]  %s3, 1024, %s45, [#allocation6], 128, 128, 8
    $region17: #{tpu_custom_call.1} parent=1 // pred_fallthru
      _
    // Predicated region
    $region18: #{tpu_custom_call.1} parent=1 // pred_check
      _
    $region19: #{tpu_custom_call.1} parent=1 // pred_check_branch
      %52 = sbr.rel (0) target = $region21
    $region20: #{tpu_custom_call.1} parent=1 // pred_region
      _
    $region21: #{tpu_custom_call.1} parent=1 // pred_fallthru
      _
    // Predicated region
    $region22: #{tpu_custom_call.1} parent=1 // pred_check
      _
    $region23: #{tpu_custom_call.1} parent=1 // pred_check_branch
      %54 = sbr.rel (0) target = $region25
    $region24: #{tpu_custom_call.1} parent=1 // pred_region
      _
    $region25: #{tpu_custom_call.1} parent=1 // pred_fallthru
      _
    // Predicated region
    $region26: #{tpu_custom_call.1} parent=1 // pred_check
      _
    $region27: #{tpu_custom_call.1} parent=1 // pred_check_branch
      %56 = sbr.rel (0) target = $region29
    $region28: #{tpu_custom_call.1} parent=1 // pred_region
      _
    $region29: #{tpu_custom_call.1} parent=1 // pred_fallthru
      _
    // Predicated region
    $region30: #{tpu_custom_call.1} parent=1 // pred_check
      _
    $region31: #{tpu_custom_call.1} parent=1 // pred_check_branch
      %58 = sbr.rel (0) target = $region33
    $region32: #{tpu_custom_call.1} parent=1 // pred_region
      %59 = dma.done [#allocation3], 128
    $region33: #{tpu_custom_call.1} parent=1 // pred_fallthru
      _
    // Predicated region
    $region34: #{tpu_custom_call.1} parent=1 // pred_check
      _
    $region35: #{tpu_custom_call.1} parent=1 // pred_check_branch
      %61 = sbr.rel (0) target = $region37
    $region36: #{tpu_custom_call.1} parent=1 // pred_region
      %62 = dma.done [#allocation6], 896
    $region37: #{tpu_custom_call.1} parent=1 // pred_fallthru
      _
    // Predicated region
    $region38: #{tpu_custom_call.1} parent=1 // pred_check
      _
    $region39: #{tpu_custom_call.1} parent=1 // pred_check_branch
      %64 = sbr.rel (0) target = $region41
    $region40: #{tpu_custom_call.1} parent=1 // pred_region
      %65 = dma.done [#allocation6], 1024
    $region41: #{tpu_custom_call.1} parent=1 // pred_fallthru
      _
    %v66 = vld [vmem:[#allocation2] sm:$0xff]
    %v67 = vld [vmem:[#allocation5] sm:$0xff]
    %v68 = vld [vmem:[#allocation5 + $0x8] sm:$0xff]
    %v69 = vld [vmem:[#allocation5 + $0x10] sm:$0xff]
    %v70 = vld [vmem:[#allocation5 + $0x18] sm:$0xff]
    %v71 = vld [vmem:[#allocation5 + $0x20] sm:$0xff]
    %v72 = vld [vmem:[#allocation5 + $0x28] sm:$0xff]
    %v73 = vld [vmem:[#allocation5 + $0x30] sm:$0xf]
    %v74 = vld [vmem:[%s2] sm:$0x1]
    %v76 = vlaneseq
    %v77 = vshrl.u32 %v76, 7
    %v78 = vsub.s32 0, %v77
    %v79 = vrot.slane %v74, %v78
    %vm81 = vcmask 424960
    %v83 = vsel %vm81, %v66, 0
    %vm85 = vcmask 1043456
    %v87 = vsel %vm85, %v73, 0
    %89 = vmatprep.subr.mxu0 0.0
    %90 = vmatpush1.msra.mxu0 %v67
    %91 = vmatprep.subr.mxu0 0.0
    %92 = vmatpush1.msra.mxu0 %v68
    %93 = vmatprep.subr.mxu0 0.0
    %94 = vmatpush1.msra.mxu0 %v69
    %95 = vmatprep.subr.mxu0 0.0
    %96 = vmatpush1.msra.mxu0 %v70
    %97 = vmatprep.subr.mxu0 0.0
    %98 = vmatpush1.msra.mxu0 %v71
    %99 = vmatprep.subr.mxu0 0.0
    %100 = vmatpush1.msra.mxu0 %v72
    %101 = vmatprep.subr.mxu0 0.0
    %102 = vmatpush1.msra.mxu0 %v87
    %103 = vmatprep.subr.mxu0 0.0
    %104 = vmatpush1.msra.mxu0 0.0
    %105 = vmatprep.subr.mxu0 0.0
    %106 = vmatpush1.msra.mxu0 0.0
    %107 = vmatprep.subr.mxu0 0.0
    %108 = vmatpush1.msra.mxu0 0.0
    %109 = vmatprep.subr.mxu0 0.0
    %110 = vmatpush1.msra.mxu0 0.0
    %111 = vmatprep.subr.mxu0 0.0
    %112 = vmatpush1.msra.mxu0 0.0
    %113 = vmatprep.subr.mxu0 0.0
    %114 = vmatpush1.msra.mxu0 0.0
    %115 = vmatprep.subr.mxu0 0.0
    %116 = vmatpush1.msra.mxu0 0.0
    %117 = vmatprep.subr.mxu0 0.0
    %118 = vmatpush1.msra.mxu0 0.0
    %119 = vmatprep.subr.mxu0 0.0
    %120 = vmatpush1.msra.mxu0 0.0
    %121 = vmatprep.subr.mxu0 0.0
    %122 = vmatpush1.msra.mxu0 0.0
    %123 = vmatprep.subr.mxu0 0.0
    %124 = vmatpush1.msra.mxu0 0.0
    %125 = vmatprep.subr.mxu0 0.0
    %126 = vmatpush1.msra.mxu0 0.0
    %127 = vmatprep.subr.mxu0 0.0
    %128 = vmatpush1.msra.mxu0 0.0
    %129 = vmatprep.subr.mxu0 0.0
    %130 = vmatpush1.msra.mxu0 0.0
    %131 = vmatprep.subr.mxu0 0.0
    %132 = vmatpush1.msra.mxu0 0.0
    %133 = vmatprep.subr.mxu0 0.0
    %134 = vmatpush1.msra.mxu0 0.0
    %135 = vmatprep.subr.mxu0 0.0
    %136 = vmatpush1.msra.mxu0 0.0
    %137 = vmatprep.subr.mxu0 0.0
    %138 = vmatpush1.msra.mxu0 0.0
    %139 = vmatprep.subr.mxu0 0.0
    %140 = vmatpush1.msra.mxu0 0.0
    %141 = vmatprep.subr.mxu0 0.0
    %142 = vmatpush1.msra.mxu0 0.0
    %143 = vmatprep.subr.mxu0 0.0
    %144 = vmatpush1.msra.mxu0 0.0
    %145 = vmatprep.subr.mxu0 0.0
    %146 = vmatpush1.msra.mxu0 0.0
    %147 = vmatprep.subr.mxu0 0.0
    %148 = vmatpush1.msra.mxu0 0.0
    %149 = vmatprep.subr.mxu0 0.0
    %150 = vmatpush1.msra.mxu0 0.0
    %151 = vmatprep.subr.mxu0 0.0
    %152 = vmatpush1.msra.mxu0 0.0
    %153 = vmatprep.mubr.f32.mxu0 0.0
    %154 = vmatmul.mubr.f32.gmra.mrb[0].mxu0 %v83
    %v155 = vpop.f32.mrb[0].mxu0
    %v156 = vadd.f32 %v79, %v155
    %v157 = vpop.f32.mrb[0].mxu0
    %158 = vdwg.mxu0
    %v159 = vmax.f32 %v156, 0.0
    %v160 = vld [vmem:[#allocation7] sm:$0xff]
    %v161 = vld [vmem:[#allocation7 + $0x8] sm:$0xff]
    %v162 = vld [vmem:[#allocation7 + $0x10] sm:$0xff]
    %v163 = vld [vmem:[#allocation7 + $0x18] sm:$0xff]
    %v164 = vld [vmem:[#allocation7 + $0x20] sm:$0xff]
    %v165 = vld [vmem:[#allocation7 + $0x28] sm:$0xff]
    %v166 = vld [vmem:[#allocation7 + $0x30] sm:$0xff]
    %v167 = vld [vmem:[#allocation7 + $0x38] sm:$0xff]
    %v168 = vld [vmem:[%s4] sm:$0x1]
    %v170 = vlaneseq
    %v171 = vshrl.u32 %v170, 7
    %v172 = vsub.s32 0, %v171
    %v173 = vrot.slane %v168, %v172
    %vm175 = vcmask 523264
    %v177 = vsel %vm175, %v159, 0
    %179 = vmatprep.subr.mxu0 0.0
    %180 = vmatpush1.msra.mxu0 %v160
    %181 = vmatprep.subr.mxu0 0.0
    %182 = vmatpush1.msra.mxu0 %v161
    %183 = vmatprep.subr.mxu0 0.0
    %184 = vmatpush1.msra.mxu0 %v162
    %185 = vmatprep.subr.mxu0 0.0
    %186 = vmatpush1.msra.mxu0 %v163
    %187 = vmatprep.subr.mxu0 0.0
    %188 = vmatpush1.msra.mxu0 %v164
    %189 = vmatprep.subr.mxu0 0.0
    %190 = vmatpush1.msra.mxu0 %v165
    %191 = vmatprep.subr.mxu0 0.0
    %192 = vmatpush1.msra.mxu0 %v166
    %193 = vmatprep.subr.mxu0 0.0
    %194 = vmatpush1.msra.mxu0 %v167
    %195 = vmatprep.subr.mxu0 0.0
    %196 = vmatpush1.msra.mxu0 0.0
    %197 = vmatprep.subr.mxu0 0.0
    %198 = vmatpush1.msra.mxu0 0.0
    %199 = vmatprep.subr.mxu0 0.0
    %200 = vmatpush1.msra.mxu0 0.0
    %201 = vmatprep.subr.mxu0 0.0
    %202 = vmatpush1.msra.mxu0 0.0
    %203 = vmatprep.subr.mxu0 0.0
    %204 = vmatpush1.msra.mxu0 0.0
    %205 = vmatprep.subr.mxu0 0.0
    %206 = vmatpush1.msra.mxu0 0.0
    %207 = vmatprep.subr.mxu0 0.0
    %208 = vmatpush1.msra.mxu0 0.0
    %209 = vmatprep.subr.mxu0 0.0
    %210 = vmatpush1.msra.mxu0 0.0
    %211 = vmatprep.subr.mxu0 0.0
    %212 = vmatpush1.msra.mxu0 0.0
    %213 = vmatprep.subr.mxu0 0.0
    %214 = vmatpush1.msra.mxu0 0.0
    %215 = vmatprep.subr.mxu0 0.0
    %216 = vmatpush1.msra.mxu0 0.0
    %217 = vmatprep.subr.mxu0 0.0
    %218 = vmatpush1.msra.mxu0 0.0
    %219 = vmatprep.subr.mxu0 0.0
    %220 = vmatpush1.msra.mxu0 0.0
    %221 = vmatprep.subr.mxu0 0.0
    %222 = vmatpush1.msra.mxu0 0.0
    %223 = vmatprep.subr.mxu0 0.0
    %224 = vmatpush1.msra.mxu0 0.0
    %225 = vmatprep.subr.mxu0 0.0
    %226 = vmatpush1.msra.mxu0 0.0
    %227 = vmatprep.subr.mxu0 0.0
    %228 = vmatpush1.msra.mxu0 0.0
    %229 = vmatprep.subr.mxu0 0.0
    %230 = vmatpush1.msra.mxu0 0.0
    %231 = vmatprep.subr.mxu0 0.0
    %232 = vmatpush1.msra.mxu0 0.0
    %233 = vmatprep.subr.mxu0 0.0
    %234 = vmatpush1.msra.mxu0 0.0
    %235 = vmatprep.subr.mxu0 0.0
    %236 = vmatpush1.msra.mxu0 0.0
    %237 = vmatprep.subr.mxu0 0.0
    %238 = vmatpush1.msra.mxu0 0.0
    %239 = vmatprep.subr.mxu0 0.0
    %240 = vmatpush1.msra.mxu0 0.0
    %241 = vmatprep.subr.mxu0 0.0
    %242 = vmatpush1.msra.mxu0 0.0
    %243 = vmatprep.mubr.f32.mxu0 0.0
    %244 = vmatmul.mubr.f32.gmra.mrb[0].mxu0 %v177
    %v245 = vpop.f32.mrb[0].mxu0
    %v246 = vadd.f32 %v173, %v245
    %v247 = vpop.f32.mrb[0].mxu0
    %248 = vdwg.mxu0
    %v249 = vmax.f32 %v246, 0.0
    %v250 = vld [vmem:[%s5] sm:$0x3]
    %v251 = vld [vmem:[%s6] sm:$0x3]
    %253 = vset.pattern.permute.xlu0 0
    %254 = vperm.xlu0 %253, %v251
    %v255 = vpop.permute.xlu0 %254
    %v258 = vsel %vm175, %v250, 0
    %v261 = vsel %vm175, %v249, 0
    %263 = vmatprep.subr.mxu0 0.0
    %264 = vmatpush1.xpose.msra.mxu0 %v261
    %265 = vmatprep.subr.mxu0 0.0
    %266 = vmatpush1.xpose.msra.mxu0 0.0
    %267 = vmatprep.subr.mxu0 0.0
    %268 = vmatpush1.xpose.msra.mxu0 0.0
    %269 = vmatprep.subr.mxu0 0.0
    %270 = vmatpush1.xpose.msra.mxu0 0.0
    %271 = vmatprep.subr.mxu0 0.0
    %272 = vmatpush1.xpose.msra.mxu0 0.0
    %273 = vmatprep.subr.mxu0 0.0
    %274 = vmatpush1.xpose.msra.mxu0 0.0
    %275 = vmatprep.subr.mxu0 0.0
    %276 = vmatpush1.xpose.msra.mxu0 0.0
    %277 = vmatprep.subr.mxu0 0.0
    %278 = vmatpush1.xpose.msra.mxu0 0.0
    %279 = vmatprep.subr.mxu0 0.0
    %280 = vmatpush1.xpose.msra.mxu0 0.0
    %281 = vmatprep.subr.mxu0 0.0
    %282 = vmatpush1.xpose.msra.mxu0 0.0
    %283 = vmatprep.subr.mxu0 0.0
    %284 = vmatpush1.xpose.msra.mxu0 0.0
    %285 = vmatprep.subr.mxu0 0.0
    %286 = vmatpush1.xpose.msra.mxu0 0.0
    %287 = vmatprep.subr.mxu0 0.0
    %288 = vmatpush1.xpose.msra.mxu0 0.0
    %289 = vmatprep.subr.mxu0 0.0
    %290 = vmatpush1.xpose.msra.mxu0 0.0
    %291 = vmatprep.subr.mxu0 0.0
    %292 = vmatpush1.xpose.msra.mxu0 0.0
    %293 = vmatprep.subr.mxu0 0.0
    %294 = vmatpush1.xpose.msra.mxu0 0.0
    %295 = vmatprep.subr.mxu0 0.0
    %296 = vmatpush1.xpose.msra.mxu0 0.0
    %297 = vmatprep.subr.mxu0 0.0
    %298 = vmatpush1.xpose.msra.mxu0 0.0
    %299 = vmatprep.subr.mxu0 0.0
    %300 = vmatpush1.xpose.msra.mxu0 0.0
    %301 = vmatprep.subr.mxu0 0.0
    %302 = vmatpush1.xpose.msra.mxu0 0.0
    %303 = vmatprep.subr.mxu0 0.0
    %304 = vmatpush1.xpose.msra.mxu0 0.0
    %305 = vmatprep.subr.mxu0 0.0
    %306 = vmatpush1.xpose.msra.mxu0 0.0
    %307 = vmatprep.subr.mxu0 0.0
    %308 = vmatpush1.xpose.msra.mxu0 0.0
    %309 = vmatprep.subr.mxu0 0.0
    %310 = vmatpush1.xpose.msra.mxu0 0.0
    %311 = vmatprep.subr.mxu0 0.0
    %312 = vmatpush1.xpose.msra.mxu0 0.0
    %313 = vmatprep.subr.mxu0 0.0
    %314 = vmatpush1.xpose.msra.mxu0 0.0
    %315 = vmatprep.subr.mxu0 0.0
    %316 = vmatpush1.xpose.msra.mxu0 0.0
    %317 = vmatprep.subr.mxu0 0.0
    %318 = vmatpush1.xpose.msra.mxu0 0.0
    %319 = vmatprep.subr.mxu0 0.0
    %320 = vmatpush1.xpose.msra.mxu0 0.0
    %321 = vmatprep.subr.mxu0 0.0
    %322 = vmatpush1.xpose.msra.mxu0 0.0
    %323 = vmatprep.subr.mxu0 0.0
    %324 = vmatpush1.xpose.msra.mxu0 0.0
    %325 = vmatprep.subr.mxu0 0.0
    %326 = vmatpush1.xpose.msra.mxu0 0.0
    %327 = vmatprep.mubr.f32.mxu0 0.0
    %328 = vmatmul.mubr.f32.gmra.mrb[0].mxu0 %v258
    %v329 = vpop.f32.mrb[0].mxu0
    %v330 = vadd.f32 %v255, %v329
    %v331 = vpop.f32.mrb[0].mxu0
    %332 = vdwg.mxu0
    %vm333 = vcmask 58368
    %334 = vst.msk [vmem:[#allocation8] sm:$0x3] %vm333, %v330
    // Predicated region
    $region42: #{tpu_custom_call.1} parent=1 // pred_check
      _
    $region43: #{tpu_custom_call.1} parent=1 // pred_check_branch
      %336 = sbr.rel (0) target = $region45
    $region44: #{tpu_custom_call.1} parent=1 // pred_region
      %s338 = ssub.s32 32, 32
      %339 = vsyncadd [#allocation4], %s338
      %s341 = sshll.u32 [#allocation8], 4
      %s342 = int_to_ptr.vmem [resolvable:$true] %s341
      %344 = dma.vmem_to_hbm [thread:$0]  %s342, 32, %s7, [#allocation4]
    $region45: #{tpu_custom_call.1} parent=1 // pred_fallthru
      _
    // Predicated region
    $region46: #{tpu_custom_call.1} parent=1 // pred_check
      _
    $region47: #{tpu_custom_call.1} parent=1 // pred_check_branch
      %346 = sbr.rel (0) target = $region49
    $region48: #{tpu_custom_call.1} parent=1 // pred_region
      %347 = dma.done [#allocation4], 32
    $region49: #{tpu_custom_call.1} parent=1 // pred_fallthru
      _
    %348 = vsyncpa [#allocation3], 1
    %349 = vsyncpa [#allocation6], 1
    %350 = vsyncpa [#allocation4], 1

</llo_original>
